<compile_context>
chip_gen: v5e
topology: v5e:2x2
jax: 0.10.0
libtpu: 0.0.40
codegen_flags: <defaults>
</compile_context>

<pallas_src>
import jax
import jax.numpy as jnp
from jax.experimental import pallas as pl
from jax.experimental.pallas import tpu as pltpu


def _pos_emb_kernel(tab_ref, o_ref):
    # tab_ref: (TR, LANE) slab rows for this grid step
    # o_ref:   (B, TR, LANE) output block -> replicate rows over the batch dim
    o_ref[...] = jnp.broadcast_to(tab_ref[...], o_ref.shape)


def _choose_row_tile(rows, lane, bsz, itemsize, sublane, budget_bytes=8 << 20):
    """Largest divisor of `rows` that is a multiple of `sublane` and whose
    double-buffered (input + batch-folded output) tiles fit the VMEM budget."""
    cands = [t for t in range(sublane, rows + 1, sublane) if rows % t == 0]
    if not cands:
        # No sublane-aligned divisor: single full-extent block (legal because the
        # block dim equals the array dim).
        return rows

    def cost(t):
        return 2 * (1 + bsz) * t * lane * itemsize

    fit = [t for t in cands if cost(t) <= budget_bytes]
    if not fit:
        return cands[0]  # smallest legal tile; vmem_limit_bytes is raised below
    best = fit[-1]
    if best == rows and len(fit) > 1:
        # Prefer >=2 grid steps so v7x's second TensorCore is not idle.
        best = fit[-2]
    return best


def positional_embedding(inputs, table):
    """inputs: (B, S) int array (only its shape is used, matching the PyTorch module).
    table: (num_embeddings, D) position-embedding weight.
    Returns (B, S, D) = table[arange(S)] broadcast over the batch dimension."""
    bsz, seq_len = inputs.shape[:2]
    num_embeddings, dim = table.shape
    if seq_len > num_embeddings:
        raise ValueError("seq_len exceeds num_embeddings of the position table")

    dtype = table.dtype
    itemsize = jnp.dtype(dtype).itemsize
    sublane = max(8, 32 // itemsize)  # f32 -> 8, bf16 -> 16, int8/fp8 -> 32

    slab = jax.lax.slice(table, (0, 0), (seq_len, dim))  # (S, D), first S rows
    slab_len = seq_len * dim

    if slab_len % 128 == 0:
        # Lane-dense relayout: view the contiguous slab as (rows, LANE) with LANE a
        # multiple of 128 so every store is a full-width vst even when D < 128.
        lane = 128
        for m in range(min(slab_len, 2048) // 128, 0, -1):
            if slab_len % (128 * m) == 0:
                lane = 128 * m
                break
        rows = slab_len // lane
        slab2 = slab.reshape(rows, lane)  # contiguous reshape (row-major order kept)
    else:
        # Ragged fallback: keep the natural (S, D) view; last block dim equals the
        # full array dim so the (8,128) rule is satisfied.
        rows, lane = seq_len, dim
        slab2 = slab

    tr = _choose_row_tile(rows, lane, bsz, itemsize, sublane)
    grid = (rows // tr,) if rows % tr == 0 else (1,)
    if rows % tr != 0:
        tr = rows  # defensive: fall back to a single full-extent block

    vmem_need = 2 * (1 + bsz) * tr * lane * itemsize + (2 << 20)
    vmem_limit = int(min(max(vmem_need, 16 << 20), 64 << 20))

    out3 = pl.pallas_call(
        _pos_emb_kernel,
        out_shape=jax.ShapeDtypeStruct((bsz, rows, lane), dtype),
        grid_spec=pltpu.PrefetchScalarGridSpec(
            num_scalar_prefetch=0,
            grid=grid,
            in_specs=[
                # Positions are arange(S): grid step s needs slab rows
                # [s*tr, (s+1)*tr).  The slab is fetched from HBM exactly once.
                pl.BlockSpec((tr, lane), lambda s: (s, 0)),
            ],
            # Batch folded into the block: one (B, tr, LANE) store per grid step.
            out_specs=pl.BlockSpec((bsz, tr, lane), lambda s: (0, s, 0)),
        ),
        compiler_params=pltpu.CompilerParams(
            dimension_semantics=("parallel",),
            vmem_limit_bytes=vmem_limit,
        ),
    )(slab2)

    # Contiguous layout is identical, so this reshape is free (bitcast).
    return out3.reshape(bsz, seq_len, dim)


if __name__ == "__main__":
    key = jax.random.PRNGKey(0)
    k_tab, k_inp, k_tab2 = jax.random.split(key, 3)

    # --- Check 1: small config matching the module's forward (f32, D=32) ---------
    embedding_dim = 32
    num_embeddings = 16
    bsz, seq_len = 2, 8

    table = jax.random.normal(k_tab, (num_embeddings, embedding_dim), dtype=jnp.float32)
    # Dummy token ids; only the shape matters for this module.
    inputs = jax.random.randint(k_inp, (bsz, seq_len), 0, num_embeddings, dtype=jnp.int32)

    out = jax.block_until_ready(positional_embedding(inputs, table))
    ref = jnp.broadcast_to(table[:seq_len][None, :, :], (bsz, seq_len, embedding_dim))
    assert out.shape == (bsz, seq_len, embedding_dim)
    assert out.dtype == jnp.float32
    assert jnp.allclose(out, ref), "mismatch vs reference (f32 case)"

    # --- Check 2: bf16 table, lane-dense D=128 ----------------------------------
    b2, s2, d2, n2 = 4, 256, 128, 512
    table2 = jax.random.normal(k_tab2, (n2, d2), dtype=jnp.float32).astype(jnp.bfloat16)
    inputs2 = jnp.zeros((b2, s2), dtype=jnp.int32)

    out2 = jax.block_until_ready(positional_embedding(inputs2, table2))
    ref2 = jnp.broadcast_to(table2[:s2][None, :, :], (b2, s2, d2))
    assert out2.shape == (b2, s2, d2)
    assert out2.dtype == jnp.bfloat16
    assert jnp.array_equal(out2, ref2), "mismatch vs reference (bf16 case)"

    # --- Check 3: ragged D (not a multiple of 128) exercises the fallback path ---
    b3, s3, d3, n3 = 2, 24, 48, 64
    table3 = jax.random.normal(k_tab, (n3, d3), dtype=jnp.float32)
    inputs3 = jnp.zeros((b3, s3), dtype=jnp.int32)

    out3 = jax.block_until_ready(positional_embedding(inputs3, table3))
    ref3 = jnp.broadcast_to(table3[:s3][None, :, :], (b3, s3, d3))
    assert out3.shape == (b3, s3, d3)
    assert jnp.allclose(out3, ref3), "mismatch vs reference (ragged case)"

    print("KERNEL_OK")
</pallas_src>

<mosaic_0001>
module attributes {stable_mosaic.version = 11 : i64} {
  func.func @_pos_emb_kernel(%arg0: i32, %arg1: memref<1x256xf32, #tpu.memory_space<vmem>>, %arg2: memref<2x1x256xf32, #tpu.memory_space<vmem>>) attributes {dimension_semantics = [#tpu.dimension_semantics<parallel>], iteration_bounds = array<i64: 1>, scalar_prefetch = 0 : i64, scratch_operands = 0 : i64, tpu.core_type = #tpu.core_type<tc>, window_params = [{transform_indices = @transform_0, window_bounds = array<i64: 1, 256>}, {transform_indices = @transform_1, window_bounds = array<i64: 2, 1, 256>}]} {
    %c0 = arith.constant 0 : index
    %c0_0 = arith.constant 0 : index
    %0 = vector.load %arg1[%c0, %c0_0] : memref<1x256xf32, #tpu.memory_space<vmem>>, vector<1x256xf32>
    %1 = vector.shape_cast %0 : vector<1x256xf32> to vector<1x1x256xf32>
    %2 = vector.broadcast %1 : vector<1x1x256xf32> to vector<2x1x256xf32>
    %c0_1 = arith.constant 0 : index
    %c0_2 = arith.constant 0 : index
    %c0_3 = arith.constant 0 : index
    %3 = vector.load %arg2[%c0_1, %c0_2, %c0_3] : memref<2x1x256xf32, #tpu.memory_space<vmem>>, vector<2x1x256xf32>
    tpu.vector_store %arg2[%c0_1, %c0_2, %c0_3], %2 {strides = array<i32>} : memref<2x1x256xf32, #tpu.memory_space<vmem>>, vector<2x1x256xf32>,
    return
  }
  func.func @transform_0(%arg0: i32) -> (i32, i32) {
    %c0_i32 = arith.constant 0 : i32
    %c0_i32_0 = arith.constant 0 : i32
    return %arg0, %c0_i32 : i32, i32
  }
  func.func @transform_1(%arg0: i32) -> (i32, i32, i32) {
    %c0_i32 = arith.constant 0 : i32
    %c0_i32_0 = arith.constant 0 : i32
    %c0_i32_1 = arith.constant 0 : i32
    return %c0_i32, %arg0, %c0_i32_0 : i32, i32, i32
  }
}

</mosaic_0001>

<llo_original>
// kernel: tpu_custom_call.1
$region0: #{tpu_custom_call.1}
  #allocation0 [shape = 'u32[]', space=smem, size = 0x4, offset = 0x4, fixed_abs, tag = 'smem constant byte address 0x4 - core index']
  #allocation1 [shape = 'u32[72,128]{1,0:T(1,128)}', space=vmem, size = 0x9000, scoped, tag = 'internal scratch']
  %s0 = inlined_call_operand.hbm [shape: f32[1,256], index: 0, kind: input, shape index: {}]
  %s1 = inlined_call_operand.hbm [shape: f32[2,1,256], index: 1, kind: output, shape index: {}]
  %s2 = sld [smem:[#allocation0]]
  $region18: #{tpu_custom_call.1} parent=0
    _
  %s4 = ssub.s32 1, %s2
  %s5 = scalar_select 0, %s4, %s2
  $region1: #{tpu_custom_call.1} parent=0
    #allocation2 [shape = 'u8[1024]{0}', space=vmem, size = 0x400, scoped, tag = 'input window, operand 0, single buffered']
    #allocation3 [shape = 's32[1]{0}', space=sflag, size = 0x4, scoped, tag = 'scoped memory for tpu_custom_call.1']
    #allocation4 [shape = 's32[1]{0}', space=sflag, size = 0x4, scoped, tag = 'scoped memory for tpu_custom_call.1']
    #allocation5 [shape = 'u8[2048]{0}', space=vmem, size = 0x800, scoped, tag = 'output window, operand 0, single buffered']
    %6 = vsyncpa [#allocation3], 0
    %7 = vsyncpa [#allocation4], 0
    // Predicated region
    $region2: #{tpu_custom_call.1} parent=1 // pred_check
      _
    $region3: #{tpu_custom_call.1} parent=1 // pred_check_branch
      %9 = sbr.rel (0) target = $region5
    $region4: #{tpu_custom_call.1} parent=1 // pred_region
      %11 = vsyncadd [#allocation3], 0
      %s13 = sshll.u32 %s0, 4
      %s14 = int_to_ptr.hbm [resolvable:$true] %s13
      %s15 = sshll.u32 [#allocation2], 4
      %s16 = int_to_ptr.vmem [resolvable:$true] %s15
      %18 = dma.hbm_to_vmem [thread:$0]  %s14, 32, %s16, [#allocation3]
    $region5: #{tpu_custom_call.1} parent=1 // pred_fallthru
      _
    // Predicated region
    $region6: #{tpu_custom_call.1} parent=1 // pred_check
      _
    $region7: #{tpu_custom_call.1} parent=1 // pred_check_branch
      %20 = sbr.rel (0) target = $region9
    $region8: #{tpu_custom_call.1} parent=1 // pred_region
      %22 = dma.done [#allocation3], 32
    $region9: #{tpu_custom_call.1} parent=1 // pred_fallthru
      _
    %v23 = vld [vmem:[#allocation2] sm:$0x3]
    %v24 = vlaneseq
    %vm25 = vcmp.ge.s32.totalorder %v24, 0
    %vm26 = vcmp.lt.s32.totalorder %v24, 256
    %vm27 = vmand %vm25, %vm26
    %28 = vst.msk [vmem:[#allocation5] sm:$0x3] %vm27, %v23
    %29 = vst.msk [vmem:[#allocation5 + $0x2] sm:$0x3] %vm27, %v23
    // Predicated region
    $region10: #{tpu_custom_call.1} parent=1 // pred_check
      _
    $region11: #{tpu_custom_call.1} parent=1 // pred_check_branch
      %31 = sbr.rel (0) target = $region13
    $region12: #{tpu_custom_call.1} parent=1 // pred_region
      %33 = vsyncadd [#allocation4], 0
      %s34 = sshll.u32 [#allocation5], 4
      %s35 = int_to_ptr.vmem [resolvable:$true] %s34
      %s36 = sshll.u32 %s1, 4
      %s37 = int_to_ptr.hbm [resolvable:$true] %s36
      %42 = dma.vmem_to_hbm [thread:$0]  %s35, 64, %s37, [#allocation4], 32, 32, 2
    $region13: #{tpu_custom_call.1} parent=1 // pred_fallthru
      _
    // Predicated region
    $region14: #{tpu_custom_call.1} parent=1 // pred_check
      _
    $region15: #{tpu_custom_call.1} parent=1 // pred_check_branch
      %44 = sbr.rel (0) target = $region17
    $region16: #{tpu_custom_call.1} parent=1 // pred_region
      %46 = dma.done [#allocation4], 64
    $region17: #{tpu_custom_call.1} parent=1 // pred_fallthru
      _
    %47 = vsyncpa [#allocation3], 1
    %48 = vsyncpa [#allocation4], 1

</llo_original>
